<compile_context>
chip_gen: v5e
topology: v5e:2x2
jax: 0.10.0
libtpu: 0.0.40
codegen_flags: <defaults>
</compile_context>

<pallas_src>
import functools

import jax
import jax.numpy as jnp
from jax.experimental import pallas as pl
from jax.experimental.pallas import tpu as pltpu


def _round_up(n, m):
    return ((n + m - 1) // m) * m


def _vmem_capacity_bytes():
    try:
        return int(pltpu.get_tpu_info().vmem_capacity_bytes)
    except Exception:
        return 64 * 1024 * 1024  # conservative: v7x per-TensorCore VMEM


def _compiler_params(dim_sem, vmem_needed_bytes):
    cap = _vmem_capacity_bytes()
    limit = min(max(int(vmem_needed_bytes) + (4 << 20), 32 << 20), cap)
    return pltpu.CompilerParams(dimension_semantics=dim_sem,
                                vmem_limit_bytes=limit)


def _fused_vmem_estimate(C, HW, R, itemsize):
    # Padded to the (8, 128) vreg tiling; inputs/outputs double-buffered.
    slab = _round_up(C, 8) * _round_up(HW, 128) * itemsize
    w_vmem = 4 * (2 * _round_up(C, 8) * _round_up(R, 128)      # w1^T, w2
                  + 8 * _round_up(R, 128)                       # b1
                  + _round_up(C, 8) * 128)                      # b2
    return 4 * slab + 2 * w_vmem


# ---------------------------------------------------------------------------
# Fused path: whole (C, HW) slab per batch element, single HBM pass.
# ---------------------------------------------------------------------------
def _se_fused_kernel(x_ref, w1t_ref, b1_ref, w2_ref, b2_ref, o_ref, *, inv_hw):
    # x_ref: (1, C, HW) block, input dtype.  Channels on sublanes, HW on lanes.
    xb = x_ref[0]
    # AdaptiveAvgPool2d(1): f32-accumulated mean over the spatial (lane) axis.
    pooled = jnp.sum(xb.astype(jnp.float32), axis=1, keepdims=True) * inv_hw  # (C, 1)

    # Squeeze MLP on VPU/XLU (R is tiny; an MXU matvec would waste the array).
    # Conv2d(C, R, 1): h[r] = sum_c w1[r, c] * pooled[c] + b1[r]
    h = jnp.sum(w1t_ref[...] * pooled, axis=0, keepdims=True) + b1_ref[...]   # (1, R)
    h = h * jax.nn.sigmoid(h)                                                 # SiLU
    # Conv2d(R, C, 1): s[c] = sum_r w2[c, r] * h[r] + b2[c]
    s = jnp.sum(w2_ref[...] * h, axis=1, keepdims=True) + b2_ref[...]         # (C, 1)
    gate = jax.nn.sigmoid(s).astype(o_ref.dtype)                              # (C, 1)

    # Gated multiply in the input dtype; gate broadcasts along the lane axis.
    o_ref[0] = xb * gate


def _se_fused(x3, w1, b1, w2, b2):
    B, C, HW = x3.shape
    R = w1.shape[0]
    itemsize = x3.dtype.itemsize

    w1t = w1.T.astype(jnp.float32)                  # (C, R)
    w2f = w2.astype(jnp.float32)                    # (C, R)
    b1r = b1.astype(jnp.float32).reshape(1, R)
    b2c = b2.astype(jnp.float32).reshape(C, 1)

    vmem_needed = _fused_vmem_estimate(C, HW, R, itemsize)

    kernel = functools.partial(_se_fused_kernel, inv_hw=1.0 / HW)
    return pl.pallas_call(
        kernel,
        out_shape=jax.ShapeDtypeStruct((B, C, HW), x3.dtype),
        grid_spec=pltpu.PrefetchScalarGridSpec(
            num_scalar_prefetch=0,
            grid=(B,),
            in_specs=[
                pl.BlockSpec((1, C, HW), lambda b: (b, 0, 0)),   # x
                pl.BlockSpec((C, R), lambda b: (0, 0)),          # w1^T
                pl.BlockSpec((1, R), lambda b: (0, 0)),          # b1
                pl.BlockSpec((C, R), lambda b: (0, 0)),          # w2
                pl.BlockSpec((C, 1), lambda b: (0, 0)),          # b2
            ],
            out_specs=pl.BlockSpec((1, C, HW), lambda b: (b, 0, 0)),
        ),
        compiler_params=_compiler_params(("parallel",), vmem_needed),
    )(x3, w1t, b1r, w2f, b2c)


# ---------------------------------------------------------------------------
# Split path: channel-tiled mean + tiny batched GEMM (JAX) + tiled multiply.
# ---------------------------------------------------------------------------
def _pooled_mean_kernel(x_ref, o_ref, *, inv_hw):
    # Spatial mean for this channel tile; f32 accumulation, lane reduce (XLU).
    o_ref[0] = (jnp.sum(x_ref[0].astype(jnp.float32), axis=1, keepdims=True)
                * inv_hw)


def _scale_kernel(x_ref, g_ref, o_ref):
    # out = x * gate; gate (tc, 1) broadcasts along the spatial (lane) axis.
    o_ref[0] = x_ref[0] * g_ref[0]


def _pick_channel_tile(C, max_rows):
    """Channel tile: a multiple-of-8 divisor of C if possible, else pad C."""
    if C <= max_rows:
        return C, C
    upper = max(8, (max_rows // 8) * 8)
    for tc in range(upper, 7, -8):
        if C % tc == 0:
            return tc, C
    tc = upper
    return tc, _round_up(C, tc)


def _se_split(x3, w1, b1, w2, b2, *, max_tile_rows=None):
    B, C, HW = x3.shape
    itemsize = x3.dtype.itemsize

    # Channel tile: multiple of 8 sublanes, ~4 MiB per tile to bound VMEM.
    # TODO(synk): the spatial axis is not further tiled; a single (8, HW)
    # channel tile is assumed to fit VMEM (true for any realistic image size).
    row_bytes = _round_up(HW, 128) * itemsize
    max_rows = max(8, ((4 << 20) // max(1, row_bytes)) // 8 * 8)
    if max_tile_rows is not None:
        max_rows = max(8, min(max_rows, max_tile_rows))
    tc, c_pad = _pick_channel_tile(C, max_rows)
    nc = c_pad // tc

    x_pad = x3
    if c_pad != C:
        # Rare (only when C > tile and C % 8 != 0); padded channels get a zero
        # gate and are sliced off the output below.
        x_pad = jnp.pad(x3, ((0, 0), (0, c_pad - C), (0, 0)))

    tile_bytes = _round_up(tc, 8) * row_bytes
    small = 4 * 128 * _round_up(tc, 8)

    # Pass 1: spatial means -> (B, c_pad, 1) f32.  Fully parallel grid.
    pooled = pl.pallas_call(
        functools.partial(_pooled_mean_kernel, inv_hw=1.0 / HW),
        out_shape=jax.ShapeDtypeStruct((B, c_pad, 1), jnp.float32),
        grid_spec=pltpu.PrefetchScalarGridSpec(
            num_scalar_prefetch=0,
            grid=(B, nc),
            in_specs=[pl.BlockSpec((1, tc, HW), lambda b, c: (b, c, 0))],
            out_specs=pl.BlockSpec((1, tc, 1), lambda b, c: (b, c, 0)),
        ),
        compiler_params=_compiler_params(("parallel", "parallel"),
                                         2 * tile_bytes + 2 * small),
    )(x_pad)

    # Squeeze MLP as one small, well-shaped batched GEMM in plain JAX (keeps
    # the 1-wide matvecs off the per-tile path).
    pooled = pooled[:, :C, 0]                                         # (B, C)
    h = pooled @ w1.astype(jnp.float32).T + b1.astype(jnp.float32)    # (B, R)
    h = h * jax.nn.sigmoid(h)                                         # SiLU
    s = h @ w2.astype(jnp.float32).T + b2.astype(jnp.float32)         # (B, C)
    gate = jax.nn.sigmoid(s).astype(x3.dtype)
    if c_pad != C:
        gate = jnp.pad(gate, ((0, 0), (0, c_pad - C)))
    gate = gate.reshape(B, c_pad, 1)

    # Pass 2: gated multiply, fully parallel (megacore-friendly).
    out = pl.pallas_call(
        _scale_kernel,
        out_shape=jax.ShapeDtypeStruct((B, c_pad, HW), x3.dtype),
        grid_spec=pltpu.PrefetchScalarGridSpec(
            num_scalar_prefetch=0,
            grid=(B, nc),
            in_specs=[pl.BlockSpec((1, tc, HW), lambda b, c: (b, c, 0)),
                      pl.BlockSpec((1, tc, 1), lambda b, c: (b, c, 0))],
            out_specs=pl.BlockSpec((1, tc, HW), lambda b, c: (b, c, 0)),
        ),
        compiler_params=_compiler_params(("parallel", "parallel"),
                                         4 * tile_bytes + 2 * small),
    )(x_pad, gate)

    return out[:, :C, :] if c_pad != C else out


# ---------------------------------------------------------------------------
# Public wrapper (PyTorch-equivalent NCHW interface, no layout shuffles).
# ---------------------------------------------------------------------------
def se_block(x, w1, b1, w2, b2):
    """SEblock forward. x: (B, C, H, W); w1: (R, C); b1: (R,); w2: (C, R); b2: (C,)."""
    B, C, H, W = x.shape
    HW = H * W
    R = w1.shape[0]
    x3 = x.reshape(B, C, HW)                       # contiguous view: free

    cap = _vmem_capacity_bytes()
    fused_budget = (cap * 3) // 8   # ~24 MiB on v7x (64 MiB VMEM), ~48 MiB on v5e/v6e

    if _fused_vmem_estimate(C, HW, R, x3.dtype.itemsize) <= fused_budget:
        # Single HBM pass: whole (C, HW) slab resident per batch element.
        out3 = _se_fused(x3, w1, b1, w2, b2)
    else:
        # Bounded-VMEM reduce + apply (one extra HBM read of x).
        out3 = _se_split(x3, w1, b1, w2, b2)

    return out3.reshape(B, C, H, W)


def se_block_ref(x, w1, b1, w2, b2):
    """Pure-JAX reference matching PyTorch SEblock semantics (f32 compute)."""
    xf = x.astype(jnp.float32)
    pooled = jnp.mean(xf, axis=(2, 3), keepdims=True)                 # (B, C, 1, 1)
    h = jnp.einsum("rc,bcij->brij", w1, pooled) + b1[None, :, None, None]
    h = h * jax.nn.sigmoid(h)                                         # SiLU
    s = jnp.einsum("cr,brij->bcij", w2, h) + b2[None, :, None, None]
    return xf * jax.nn.sigmoid(s)


def _rand_se_params(key, C, R):
    k1, k2, k3, k4 = jax.random.split(key, 4)
    w1 = jax.random.normal(k1, (R, C), dtype=jnp.float32) * 0.1   # Conv2d(C,R,1)
    b1 = jax.random.normal(k2, (R,), dtype=jnp.float32) * 0.1
    w2 = jax.random.normal(k3, (C, R), dtype=jnp.float32) * 0.1   # Conv2d(R,C,1)
    b2 = jax.random.normal(k4, (C,), dtype=jnp.float32) * 0.1
    return w1, b1, w2, b2


if __name__ == "__main__":
    key = jax.random.PRNGKey(0)

    # --- fused path (the default at EfficientNet-like sizes) ---------------
    B, C, H, W, R = 2, 4, 16, 16, 2
    kx, kp, key = jax.random.split(key, 3)
    x = jax.random.normal(kx, (B, C, H, W), dtype=jnp.float32)
    w1, b1, w2, b2 = _rand_se_params(kp, C, R)

    ref = se_block_ref(x, w1, b1, w2, b2)
    out = jax.block_until_ready(se_block(x, w1, b1, w2, b2))
    assert out.shape == (B, C, H, W)
    assert jnp.allclose(out, ref, atol=1e-5, rtol=1e-5), "fused path mismatch"

    # --- bf16 I/O smoke test (gate multiply/stores bf16, pooling/MLP f32) ---
    xb = x.astype(jnp.bfloat16)
    out_bf = jax.block_until_ready(se_block(xb, w1, b1, w2, b2))
    ref_bf = se_block_ref(xb.astype(jnp.float32), w1, b1, w2, b2)
    assert out_bf.dtype == jnp.bfloat16
    assert jnp.allclose(out_bf.astype(jnp.float32), ref_bf,
                        atol=5e-2, rtol=5e-2), "bf16 path mismatch"

    # --- split path: channel tile that divides C ----------------------------
    B2, C2, H2, W2, R2 = 2, 48, 8, 8, 12
    kx2, kp2, key = jax.random.split(key, 3)
    x2 = jax.random.normal(kx2, (B2, C2, H2, W2), dtype=jnp.float32)
    p2 = _rand_se_params(kp2, C2, R2)
    ref2 = se_block_ref(x2, *p2)
    out2 = _se_split(x2.reshape(B2, C2, H2 * W2), *p2, max_tile_rows=16)
    out2 = jax.block_until_ready(out2).reshape(B2, C2, H2, W2)
    assert jnp.allclose(out2, ref2, atol=1e-5, rtol=1e-5), "split path mismatch"

    # --- split path: channel padding branch (C % 8 != 0, C > tile) ----------
    B3, C3, H3, W3, R3 = 2, 20, 8, 8, 5
    kx3, kp3, key = jax.random.split(key, 3)
    xp = jax.random.normal(kx3, (B3, C3, H3, W3), dtype=jnp.float32)
    p3 = _rand_se_params(kp3, C3, R3)
    ref3 = se_block_ref(xp, *p3)
    out3 = _se_split(xp.reshape(B3, C3, H3 * W3), *p3, max_tile_rows=8)
    out3 = jax.block_until_ready(out3).reshape(B3, C3, H3, W3)
    assert jnp.allclose(out3, ref3, atol=1e-5, rtol=1e-5), "split pad-path mismatch"

    print("KERNEL_OK")
</pallas_src>

<mosaic_0001>
module attributes {stable_mosaic.version = 11 : i64} {
  func.func @_se_fused_kernel(%arg0: i32, %arg1: memref<1x4x256xf32, #tpu.memory_space<vmem>>, %arg2: memref<4x2xf32, #tpu.memory_space<vmem>>, %arg3: memref<1x2xf32, #tpu.memory_space<vmem>>, %arg4: memref<4x2xf32, #tpu.memory_space<vmem>>, %arg5: memref<4x1xf32, #tpu.memory_space<vmem>>, %arg6: memref<1x4x256xf32, #tpu.memory_space<vmem>>) attributes {dimension_semantics = [#tpu.dimension_semantics<parallel>], iteration_bounds = array<i64: 2>, scalar_prefetch = 0 : i64, scratch_operands = 0 : i64, tpu.core_type = #tpu.core_type<tc>, window_params = [{transform_indices = @transform_0, window_bounds = array<i64: 1, 4, 256>}, {pipeline_mode = #tpu.pipeline_mode<synchronous>, transform_indices = @transform_1, window_bounds = array<i64: 4, 2>}, {pipeline_mode = #tpu.pipeline_mode<synchronous>, transform_indices = @transform_2, window_bounds = array<i64: 1, 2>}, {pipeline_mode = #tpu.pipeline_mode<synchronous>, transform_indices = @transform_3, window_bounds = array<i64: 4, 2>}, {pipeline_mode = #tpu.pipeline_mode<synchronous>, transform_indices = @transform_4, window_bounds = array<i64: 4, 1>}, {transform_indices = @transform_5, window_bounds = array<i64: 1, 4, 256>}]} {
    %c0 = arith.constant 0 : index
    %c0_0 = arith.constant 0 : index
    %c0_1 = arith.constant 0 : index
    %0 = vector.load %arg1[%c0, %c0_0, %c0_1] : memref<1x4x256xf32, #tpu.memory_space<vmem>>, vector<1x4x256xf32>
    %1 = vector.shape_cast %0 : vector<1x4x256xf32> to vector<4x256xf32>
    %cst = arith.constant dense<0.000000e+00> : vector<4xf32>
    %2 = vector.multi_reduction <add>, %1, %cst [1] : vector<4x256xf32> to vector<4xf32>
    %3 = vector.shape_cast %2 : vector<4xf32> to vector<4x1xf32>
    %cst_2 = arith.constant 3.906250e-03 : f32
    %4 = vector.broadcast %cst_2 : f32 to vector<4x1xf32>
    %5 = arith.mulf %3, %4 : vector<4x1xf32>
    %c0_3 = arith.constant 0 : index
    %c0_4 = arith.constant 0 : index
    %6 = vector.load %arg2[%c0_3, %c0_4] : memref<4x2xf32, #tpu.memory_space<vmem>>, vector<4x2xf32>
    %7 = vector.broadcast %5 : vector<4x1xf32> to vector<4x2xf32>
    %8 = arith.mulf %6, %7 : vector<4x2xf32>
    %cst_5 = arith.constant dense<0.000000e+00> : vector<2xf32>
    %9 = vector.multi_reduction <add>, %8, %cst_5 [0] : vector<4x2xf32> to vector<2xf32>
    %10 = vector.shape_cast %9 : vector<2xf32> to vector<1x2xf32>
    %c0_6 = arith.constant 0 : index
    %c0_7 = arith.constant 0 : index
    %11 = vector.load %arg3[%c0_6, %c0_7] : memref<1x2xf32, #tpu.memory_space<vmem>>, vector<1x2xf32>
    %12 = arith.addf %10, %11 : vector<1x2xf32>
    %13 = arith.negf %12 : vector<1x2xf32>
    %14 = math.exp %13 : vector<1x2xf32>
    %cst_8 = arith.constant 1.000000e+00 : f32
    %15 = vector.broadcast %cst_8 : f32 to vector<1x2xf32>
    %16 = arith.addf %15, %14 : vector<1x2xf32>
    %17 = arith.divf %15, %16 : vector<1x2xf32>
    %18 = arith.mulf %12, %17 : vector<1x2xf32>
    %c0_9 = arith.constant 0 : index
    %c0_10 = arith.constant 0 : index
    %19 = vector.load %arg4[%c0_9, %c0_10] : memref<4x2xf32, #tpu.memory_space<vmem>>, vector<4x2xf32>
    %20 = vector.broadcast %18 : vector<1x2xf32> to vector<4x2xf32>
    %21 = arith.mulf %19, %20 : vector<4x2xf32>
    %cst_11 = arith.constant dense<0.000000e+00> : vector<4xf32>
    %22 = vector.multi_reduction <add>, %21, %cst_11 [1] : vector<4x2xf32> to vector<4xf32>
    %23 = vector.shape_cast %22 : vector<4xf32> to vector<4x1xf32>
    %c0_12 = arith.constant 0 : index
    %c0_13 = arith.constant 0 : index
    %24 = vector.load %arg5[%c0_12, %c0_13] : memref<4x1xf32, #tpu.memory_space<vmem>>, vector<4x1xf32>
    %25 = arith.addf %23, %24 : vector<4x1xf32>
    %26 = arith.negf %25 : vector<4x1xf32>
    %27 = math.exp %26 : vector<4x1xf32>
    %cst_14 = arith.constant 1.000000e+00 : f32
    %28 = vector.broadcast %cst_14 : f32 to vector<4x1xf32>
    %29 = arith.addf %28, %27 : vector<4x1xf32>
    %30 = arith.divf %28, %29 : vector<4x1xf32>
    %31 = vector.broadcast %30 : vector<4x1xf32> to vector<4x256xf32>
    %32 = arith.mulf %1, %31 : vector<4x256xf32>
    %c0_15 = arith.constant 0 : index
    %c0_16 = arith.constant 0 : index
    %c0_17 = arith.constant 0 : index
    %33 = vector.load %arg6[%c0_15, %c0_16, %c0_17] : memref<1x4x256xf32, #tpu.memory_space<vmem>>, vector<1x4x256xf32>
    %34 = vector.shape_cast %33 : vector<1x4x256xf32> to vector<4x256xf32>
    %35 = vector.shape_cast %32 : vector<4x256xf32> to vector<1x4x256xf32>
    tpu.vector_store %arg6[%c0_15, %c0_16, %c0_17], %35 {strides = array<i32>} : memref<1x4x256xf32, #tpu.memory_space<vmem>>, vector<1x4x256xf32>,
    return
  }
  func.func @transform_0(%arg0: i32) -> (i32, i32, i32) {
    %c0_i32 = arith.constant 0 : i32
    %c0_i32_0 = arith.constant 0 : i32
    %c0_i32_1 = arith.constant 0 : i32
    return %arg0, %c0_i32, %c0_i32_0 : i32, i32, i32
  }
  func.func @transform_1(%arg0: i32) -> (i32, i32) {
    %c0_i32 = arith.constant 0 : i32
    %c0_i32_0 = arith.constant 0 : i32
    %c0_i32_1 = arith.constant 0 : i32
    return %c0_i32, %c0_i32_0 : i32, i32
  }
  func.func @transform_2(%arg0: i32) -> (i32, i32) {
    %c0_i32 = arith.constant 0 : i32
    %c0_i32_0 = arith.constant 0 : i32
    %c0_i32_1 = arith.constant 0 : i32
    return %c0_i32, %c0_i32_0 : i32, i32
  }
  func.func @transform_3(%arg0: i32) -> (i32, i32) {
    %c0_i32 = arith.constant 0 : i32
    %c0_i32_0 = arith.constant 0 : i32
    %c0_i32_1 = arith.constant 0 : i32
    return %c0_i32, %c0_i32_0 : i32, i32
  }
  func.func @transform_4(%arg0: i32) -> (i32, i32) {
    %c0_i32 = arith.constant 0 : i32
    %c0_i32_0 = arith.constant 0 : i32
    %c0_i32_1 = arith.constant 0 : i32
    return %c0_i32, %c0_i32_0 : i32, i32
  }
  func.func @transform_5(%arg0: i32) -> (i32, i32, i32) {
    %c0_i32 = arith.constant 0 : i32
    %c0_i32_0 = arith.constant 0 : i32
    %c0_i32_1 = arith.constant 0 : i32
    return %arg0, %c0_i32, %c0_i32_0 : i32, i32, i32
  }
}

</mosaic_0001>

<llo_original>
// kernel: tpu_custom_call.1
$region0: #{tpu_custom_call.1}
  #allocation0 [shape = 'u32[]', space=smem, size = 0x4, offset = 0x4, fixed_abs, tag = 'smem constant byte address 0x4 - core index']
  #allocation1 [shape = 'u32[72,128]{1,0:T(1,128)}', space=vmem, size = 0x9000, scoped, tag = 'internal scratch']
  %s0 = inlined_call_operand.hbm [shape: f32[2,4,256], index: 0, kind: input, shape index: {}]
  %s1 = inlined_call_operand.vmem [shape: f32[4,2], index: 1, kind: input, shape index: {}]
  %s2 = inlined_call_operand.vmem [shape: f32[1,2], index: 2, kind: input, shape index: {}]
  %s3 = inlined_call_operand.vmem [shape: f32[4,2], index: 3, kind: input, shape index: {}]
  %s4 = inlined_call_operand.vmem [shape: f32[4,1], index: 4, kind: input, shape index: {}]
  %s5 = inlined_call_operand.hbm [shape: f32[2,4,256], index: 5, kind: output, shape index: {}]
  %s6 = sld [smem:[#allocation0]]
  $region57: #{tpu_custom_call.1} parent=0
    _
  %s8 = ssub.s32 1, %s6
  %s9 = scalar_select 0, %s8, %s6
  $region1: #{tpu_custom_call.1} parent=0
    #allocation2 [shape = 'u8[8192]{0}', space=vmem, size = 0x2000, scoped, tag = 'input window, operand 0']
    #allocation3 [shape = 's32[2]{0}', space=sflag, size = 0x8, scoped, tag = 'scoped memory for tpu_custom_call.1']
    #allocation4 [shape = 's32[2]{0}', space=sflag, size = 0x8, scoped, tag = 'scoped memory for tpu_custom_call.1']
    #allocation5 [shape = 'u8[8192]{0}', space=vmem, size = 0x2000, scoped, tag = 'output window, operand 0']
    %10 = vsyncpa [#allocation3], 0
    %s11 = scalar_lea.sflag [#allocation3], 1
    %12 = vsyncpa %s11, 0
    %13 = vsyncpa [#allocation4], 0
    %s14 = scalar_lea.sflag [#allocation4], 1
    %15 = vsyncpa %s14, 0
    loop: start=0, step=1, limit=4
    $region2: #{tpu_custom_call.1} parent=1 // loop_pre_header
      _
    $region3: #{tpu_custom_call.1} parent=1 // loop_header
      %s17 = sphi 0, %s21
      %p18 = scmp.ge.s32.totalorder %s17, 4
      %s27 = sphi 0, %s29
      %s30 = sphi 0, %s27
      %s31 = sphi 0, %s30
      %s47 = sphi 0, %s31
      %s51 = sphi 0, %s51
      %s53 = sphi 0, %s51
      %s54 = sphi 0, %s53
      %s68 = sphi 0, %s54
      %s72 = sphi 0, %s72
      %s74 = sphi 0, %s72
      %s75 = sphi 0, %s74
      %s89 = sphi 0, %s75
      %s93 = sphi 0, %s93
      %s95 = sphi 0, %s93
      %s96 = sphi 0, %s95
      %s110 = sphi 0, %s96
      %s114 = sphi 0, %s114
      %s116 = sphi 0, %s114
      %s117 = sphi 0, %s116
      %s131 = sphi 0, %s117
      %s137 = sphi 0, %s139
      %s140 = sphi 0, %s137
      %s141 = sphi 0, %s140
      %s157 = sphi 0, %s141
    $region4: #{tpu_custom_call.1} parent=1 // loop_header_branch
      %20 = sbr.rel (%p18) target = $region8
    $region5: #{tpu_custom_call.1} parent=1 // loop_body
      %s22 = ssub.s32 %s17, 1
      %s23 = ssub.s32 %s17, 2
      %s24 = sadd.s32 %s17, 1
      %s25 = ssub.s32 %s17, %s24
      %p26 = scmp.eq.s32.totalorder %s25, 0
      %s28 = sadd.s32 %s27, 1
      %s29 = scalar_select %p26, %s27, %s28
      %p32 = pneg %p26
      %p33 = scmp.eq.s32.totalorder %s17, 1
      %p34 = por %p32, %p33
      %p35 = scmp.ne.s32.totalorder %s27, %s30
      %p36 = scmp.eq.s32.totalorder %s17, 0
      %p37 = por %p35, %p36
      %p38 = scmp.ne.s32.totalorder %s27, %s30
      %p39 = scmp.eq.s32.totalorder %s22, 1
      %p40 = por %p38, %p39
      %p41 = scmp.ne.s32.totalorder %s30, %s31
      %p42 = scmp.eq.s32.totalorder %s22, 0
      %p43 = por %p41, %p42
      %p44 = scmp.ne.s32.totalorder %s30, %s31
      %p45 = scmp.eq.s32.totalorder %s23, 1
      %p46 = por %p44, %p45
      %p48 = scmp.ne.s32.totalorder %s31, %s47
      %p49 = scmp.eq.s32.totalorder %s23, 0
      %p50 = por %p48, %p49
      %s52 = sadd.s32 %s51, 1
      %p55 = scmp.eq.s32.totalorder %s17, 1
      %p56 = scmp.ne.s32.totalorder %s51, %s53
      %p57 = scmp.eq.s32.totalorder %s17, 0
      %p58 = por %p56, %p57
      %p59 = scmp.ne.s32.totalorder %s51, %s53
      %p60 = scmp.eq.s32.totalorder %s22, 1
      %p61 = por %p59, %p60
      %p62 = scmp.ne.s32.totalorder %s53, %s54
      %p63 = scmp.eq.s32.totalorder %s22, 0
      %p64 = por %p62, %p63
      %p65 = scmp.ne.s32.totalorder %s53, %s54
      %p66 = scmp.eq.s32.totalorder %s23, 1
      %p67 = por %p65, %p66
      %p69 = scmp.ne.s32.totalorder %s54, %s68
      %p70 = scmp.eq.s32.totalorder %s23, 0
      %p71 = por %p69, %p70
      %s73 = sadd.s32 %s72, 1
      %p76 = scmp.eq.s32.totalorder %s17, 1
      %p77 = scmp.ne.s32.totalorder %s72, %s74
      %p78 = scmp.eq.s32.totalorder %s17, 0
      %p79 = por %p77, %p78
      %p80 = scmp.ne.s32.totalorder %s72, %s74
      %p81 = scmp.eq.s32.totalorder %s22, 1
      %p82 = por %p80, %p81
      %p83 = scmp.ne.s32.totalorder %s74, %s75
      %p84 = scmp.eq.s32.totalorder %s22, 0
      %p85 = por %p83, %p84
      %p86 = scmp.ne.s32.totalorder %s74, %s75
      %p87 = scmp.eq.s32.totalorder %s23, 1
      %p88 = por %p86, %p87
      %p90 = scmp.ne.s32.totalorder %s75, %s89
      %p91 = scmp.eq.s32.totalorder %s23, 0
      %p92 = por %p90, %p91
      %s94 = sadd.s32 %s93, 1
      %p97 = scmp.eq.s32.totalorder %s17, 1
      %p98 = scmp.ne.s32.totalorder %s93, %s95
      %p99 = scmp.eq.s32.totalorder %s17, 0
      %p100 = por %p98, %p99
      %p101 = scmp.ne.s32.totalorder %s93, %s95
      %p102 = scmp.eq.s32.totalorder %s22, 1
      %p103 = por %p101, %p102
      %p104 = scmp.ne.s32.totalorder %s95, %s96
      %p105 = scmp.eq.s32.totalorder %s22, 0
      %p106 = por %p104, %p105
      %p107 = scmp.ne.s32.totalorder %s95, %s96
      %p108 = scmp.eq.s32.totalorder %s23, 1
      %p109 = por %p107, %p108
      %p111 = scmp.ne.s32.totalorder %s96, %s110
      %p112 = scmp.eq.s32.totalorder %s23, 0
      %p113 = por %p111, %p112
      %s115 = sadd.s32 %s114, 1
      %p118 = scmp.eq.s32.totalorder %s17, 1
      %p119 = scmp.ne.s32.totalorder %s114, %s116
      %p120 = scmp.eq.s32.totalorder %s17, 0
      %p121 = por %p119, %p120
      %p122 = scmp.ne.s32.totalorder %s114, %s116
      %p123 = scmp.eq.s32.totalorder %s22, 1
      %p124 = por %p122, %p123
      %p125 = scmp.ne.s32.totalorder %s116, %s117
      %p126 = scmp.eq.s32.totalorder %s22, 0
      %p127 = por %p125, %p126
      %p128 = scmp.ne.s32.totalorder %s116, %s117
      %p129 = scmp.eq.s32.totalorder %s23, 1
      %p130 = por %p128, %p129
      %p132 = scmp.ne.s32.totalorder %s117, %s131
      %p133 = scmp.eq.s32.totalorder %s23, 0
      %p134 = por %p132, %p133
      %s135 = ssub.s32 %s17, %s24
      %p136 = scmp.eq.s32.totalorder %s135, 0
      %s138 = sadd.s32 %s137, 1
      %s139 = scalar_select %p136, %s137, %s138
      %p142 = pneg %p136
      %p143 = scmp.eq.s32.totalorder %s17, 1
      %p144 = por %p142, %p143
      %p145 = scmp.ne.s32.totalorder %s137, %s140
      %p146 = scmp.eq.s32.totalorder %s17, 0
      %p147 = por %p145, %p146
      %p148 = scmp.ne.s32.totalorder %s137, %s140
      %p149 = scmp.eq.s32.totalorder %s22, 1
      %p150 = por %p148, %p149
      %p151 = scmp.ne.s32.totalorder %s140, %s141
      %p152 = scmp.eq.s32.totalorder %s22, 0
      %p153 = por %p151, %p152
      %p154 = scmp.ne.s32.totalorder %s140, %s141
      %p155 = scmp.eq.s32.totalorder %s23, 1
      %p156 = por %p154, %p155
      %p158 = scmp.ne.s32.totalorder %s141, %s157
      %p159 = scmp.eq.s32.totalorder %s23, 0
      %p160 = por %p158, %p159
      %p161 = scmp.le.s32.totalorder 1, %s17
      %p162 = scmp.lt.s32.totalorder %s17, 3
      %p163 = pnand %p161, %p162
      %p164 = pneg %p163
      // Predicated region
      $region9: #{tpu_custom_call.1} parent=5 // pred_check
        _
      $region10: #{tpu_custom_call.1} parent=5 // pred_check_branch
        %166 = sbr.rel (%p163) target = $region12
      $region11: #{tpu_custom_call.1} parent=5 // pred_region
        %s167 = ssub.s32 %s17, 1
        // Predicated region
        $region13: #{tpu_custom_call.1} parent=11 // pred_check
          %p168 = pneg %p64
        $region14: #{tpu_custom_call.1} parent=11 // pred_check_branch
          %170 = sbr.rel (%p168) target = $region16
        $region15: #{tpu_custom_call.1} parent=11 // pred_region
          _
        $region16: #{tpu_custom_call.1} parent=11 // pred_fallthru
          _
        // Predicated region
        $region17: #{tpu_custom_call.1} parent=11 // pred_check
          %p171 = pneg %p85
        $region18: #{tpu_custom_call.1} parent=11 // pred_check_branch
          %173 = sbr.rel (%p171) target = $region20
        $region19: #{tpu_custom_call.1} parent=11 // pred_region
          _
        $region20: #{tpu_custom_call.1} parent=11 // pred_fallthru
          _
        // Predicated region
        $region21: #{tpu_custom_call.1} parent=11 // pred_check
          %p174 = pneg %p106
        $region22: #{tpu_custom_call.1} parent=11 // pred_check_branch
          %176 = sbr.rel (%p174) target = $region24
        $region23: #{tpu_custom_call.1} parent=11 // pred_region
          _
        $region24: #{tpu_custom_call.1} parent=11 // pred_fallthru
          _
        // Predicated region
        $region25: #{tpu_custom_call.1} parent=11 // pred_check
          %p177 = pneg %p127
        $region26: #{tpu_custom_call.1} parent=11 // pred_check_branch
          %179 = sbr.rel (%p177) target = $region28
        $region27: #{tpu_custom_call.1} parent=11 // pred_region
          _
        $region28: #{tpu_custom_call.1} parent=11 // pred_fallthru
          _
      $region12: #{tpu_custom_call.1} parent=5 // pred_fallthru
        _
      %p180 = scmp.lt.s32.totalorder %s17, 2
      // Predicated region
      $region29: #{tpu_custom_call.1} parent=5 // pred_check
        %p181 = pneg %p180
      $region30: #{tpu_custom_call.1} parent=5 // pred_check_branch
        %183 = sbr.rel (%p181) target = $region32
      $region31: #{tpu_custom_call.1} parent=5 // pred_region
        // Predicated region
        $region33: #{tpu_custom_call.1} parent=31 // pred_check
          %p184 = pneg %p37
        $region34: #{tpu_custom_call.1} parent=31 // pred_check_branch
          %186 = sbr.rel (%p184) target = $region36
        $region35: #{tpu_custom_call.1} parent=31 // pred_region
          %s187 = sand.u32 %s27, 1
          %s188 = scalar_lea.sflag [#allocation3], %s187
          %s189 = sand.u32 %s27, 1
          %s190 = smul.addr %s189, 8
          %s191 = scalar_lea.vmem [#allocation2], %s190
          %193 = vsyncadd %s188, 0
          %s194 = smul.addr %s17, 2
          %s195 = smul.addr %s194, 4
          %s196 = scalar_lea.hbm %s0, %s195
          %s198 = sshll.u32 %s196, 4
          %s199 = int_to_ptr.hbm [resolvable:$true] %s198
          %s200 = sshll.u32 %s191, 4
          %s201 = int_to_ptr.vmem [resolvable:$true] %s200
          %203 = dma.hbm_to_vmem [thread:$0]  %s199, 128, %s201, %s188
        $region36: #{tpu_custom_call.1} parent=31 // pred_fallthru
          _
      $region32: #{tpu_custom_call.1} parent=5 // pred_fallthru
        _
      %p204 = scmp.le.s32.totalorder 1, %s17
      %p205 = scmp.lt.s32.totalorder %s17, 3
      %p206 = pnand %p204, %p205
      %p207 = pneg %p206
      // Predicated region
      $region37: #{tpu_custom_call.1} parent=5 // pred_check
        _
      $region38: #{tpu_custom_call.1} parent=5 // pred_check_branch
        %209 = sbr.rel (%p206) target = $region40
      $region39: #{tpu_custom_call.1} parent=5 // pred_region
        %s210 = ssub.s32 %s17, 1
        %s211 = sand.u32 %s30, 1
        %s212 = scalar_lea.sflag [#allocation3], %s211
        %s213 = sand.u32 %s30, 1
        %s214 = smul.addr %s213, 8
        %s215 = scalar_lea.vmem [#allocation2], %s214
        // Predicated region
        $region41: #{tpu_custom_call.1} parent=39 // pred_check
          %p216 = pneg %p43
        $region42: #{tpu_custom_call.1} parent=39 // pred_check_branch
          %218 = sbr.rel (%p216) target = $region44
        $region43: #{tpu_custom_call.1} parent=39 // pred_region
          %220 = dma.done %s212, 128
        $region44: #{tpu_custom_call.1} parent=39 // pred_fallthru
          _
        %s221 = sand.u32 %s30, 1
        %s222 = scalar_lea.sflag [#allocation3], %s221
        %s223 = sand.u32 %s30, 1
        %s224 = smul.addr %s223, 8
        %s225 = scalar_lea.vmem [#allocation2], %s224
        %p226 = pneg %p43
        %p227 = pneg %p40
        %p228 = pneg %p64
        %p229 = pneg %p61
        %p230 = pneg %p85
        %p231 = pneg %p82
        %p232 = pneg %p106
        %p233 = pneg %p103
        %p234 = pneg %p127
        %p235 = pneg %p124
        %p236 = pneg %p153
        %p237 = pneg %p150
        %s238 = sand.u32 %s140, 1
        %s239 = scalar_lea.sflag [#allocation4], %s238
        %s240 = sand.u32 %s140, 1
        %s241 = smul.addr %s240, 8
        %s242 = scalar_lea.vmem [#allocation5], %s241
        %v243 = vld [vmem:[%s215] sm:$0xff]
        %245 = vst [vmem:[#allocation1] ss:$2 sm:$0xff] %v243
        %v246 = vld.sshfl [vmem:[#allocation1] sm:$0xff pattern:$0x75316420]
        %v247 = vld.sshfl [vmem:[#allocation1 + $0x8] sm:$0xff pattern:$0x75316420]
        %vm250 = vcmask 1043456
        %v251 = vsel %vm250, %v246, 0.0
        %v252 = vsel %vm250, %v247, 0.0
        %v253 = vadd.f32 %v251, %v252
        %254 = vadd.xlane.f32.xlu0 %v253
        %v255 = vpop.xlane.xlu0 %254
        %v256 = vmul.f32 %v255, 0.00390625
        %v257 = vld [vmem:[%s1] sm:$0xf]
        %v258 = vmul.f32 %v257, %v256
        %vm259 = vcmask 11264
        %v260 = vsel %vm259, %v258, 0.0
        %v261 = vrot.slane %v260, 4
        %v262 = vadd.f32 %v260, %v261
        %v263 = vrot.slane %v262, 2
        %v264 = vadd.f32 %v262, %v263
        %v265 = vrot.slane %v264, 1
        %v266 = vadd.f32 %v264, %v265
        %v267 = vld [vmem:[%s2] sm:$0x1]
        %v268 = vadd.f32 %v266, %v267
        %v269 = vxor.u32 %v268, 2147483648
        %v270 = vmul.f32 %v269, 1.442695
        %v271 = vpow.pop %v270
        %v272 = vadd.f32 %v271, 1.0
        %v273 = vrcp.pop %v272
        %v274 = vmul.f32 %v272, %v273
        %v275 = vsub.f32 1.0, %v274
        %v276 = vmul.f32 %v273, %v275
        %v277 = vadd.f32 %v273, %v276
        %vm278 = vweird.f32 %v272
        %vm279 = vweird.f32 %v273
        %vm280 = vmor %vm278, %vm279
        %v281 = vsel %vm280, %v273, %v277
        %v282 = vand.u32 2147483647, %v272
        %vm283 = vcmp.eq.f32.partialorder %v282, 8.507059e+37
        %v284 = vand.u32 %v272, 2147483648
        %v285 = vor.u32 1.1754944e-38, %v284
        %v286 = vsel %vm283, %v285, %v281
        %v287 = vmul.f32 1.0, %v286
        %v288 = vmul.f32 %v268, %v287
        %v289 = vld [vmem:[%s3] sm:$0xf]
        %v290 = vperm.slane %v288, 0
        %v291 = vmul.f32 %v289, %v290
        %v292 = vsel %vm259, %v291, 0.0
        %293 = vadd.xlane.f32.xlu0 %v292
        %v294 = vpop.xlane.xlu0 %293
        %v295 = vld [vmem:[%s4] sm:$0xf]
        %v296 = vadd.f32 %v294, %v295
        %v297 = vxor.u32 %v296, 2147483648
        %v298 = vmul.f32 %v297, 1.442695
        %v299 = vpow.pop %v298
        %v300 = vadd.f32 %v299, 1.0
        %v301 = vrcp.pop %v300
        %v302 = vmul.f32 %v300, %v301
        %v303 = vsub.f32 1.0, %v302
        %v304 = vmul.f32 %v301, %v303
        %v305 = vadd.f32 %v301, %v304
        %vm306 = vweird.f32 %v300
        %vm307 = vweird.f32 %v301
        %vm308 = vmor %vm306, %vm307
        %v309 = vsel %vm308, %v301, %v305
        %v310 = vand.u32 2147483647, %v300
        %vm311 = vcmp.eq.f32.partialorder %v310, 8.507059e+37
        %v312 = vand.u32 %v300, 2147483648
        %v313 = vor.u32 1.1754944e-38, %v312
        %v314 = vsel %vm311, %v313, %v309
        %v315 = vmul.f32 1.0, %v314
        %317 = vset.pattern.permute.xlu0 0
        %318 = vperm.xlu0 %317, %v315
        %v319 = vpop.permute.xlu0 %318
        %v321 = vunpack.c.l.s4 839922192
        %v322 = vunpack.c.0.s8 %v321
        %v323 = vperm.slane %v319, %v322
        %v325 = vmul.f32 %v243, %v323
        %326 = vst [vmem:[%s242] sm:$0xff] %v325
        %s327 = sand.u32 %s140, 1
        %s328 = scalar_lea.sflag [#allocation4], %s327
        %s329 = sand.u32 %s140, 1
        %s330 = smul.addr %s329, 8
        %s331 = scalar_lea.vmem [#allocation5], %s330
        // Predicated region
        $region45: #{tpu_custom_call.1} parent=39 // pred_check
          %p332 = pneg %p150
        $region46: #{tpu_custom_call.1} parent=39 // pred_check_branch
          %334 = sbr.rel (%p332) target = $region48
        $region47: #{tpu_custom_call.1} parent=39 // pred_region
          %336 = vsyncadd %s328, 0
          %s337 = smul.addr %s22, 2
          %s338 = smul.addr %s337, 4
          %s339 = scalar_lea.hbm %s5, %s338
          %s341 = sshll.u32 %s331, 4
          %s342 = int_to_ptr.vmem [resolvable:$true] %s341
          %s343 = sshll.u32 %s339, 4
          %s344 = int_to_ptr.hbm [resolvable:$true] %s343
          %346 = dma.vmem_to_hbm [thread:$0]  %s342, 128, %s344, %s328
        $region48: #{tpu_custom_call.1} parent=39 // pred_fallthru
          _
      $region40: #{tpu_custom_call.1} parent=5 // pred_fallthru
        _
      %p347 = scmp.le.s32.totalorder 2, %s17
      // Predicated region
      $region49: #{tpu_custom_call.1} parent=5 // pred_check
        %p348 = pneg %p347
      $region50: #{tpu_custom_call.1} parent=5 // pred_check_branch
        %350 = sbr.rel (%p348) target = $region52
      $region51: #{tpu_custom_call.1} parent=5 // pred_region
        %s351 = ssub.s32 %s17, 2
        // Predicated region
        $region53: #{tpu_custom_call.1} parent=51 // pred_check
          %p352 = pneg %p156
        $region54: #{tpu_custom_call.1} parent=51 // pred_check_branch
          %354 = sbr.rel (%p352) target = $region56
        $region55: #{tpu_custom_call.1} parent=51 // pred_region
          %s355 = sand.u32 %s141, 1
          %s356 = scalar_lea.sflag [#allocation4], %s355
          %s357 = sand.u32 %s141, 1
          %s358 = smul.addr %s357, 8
          %s359 = scalar_lea.vmem [#allocation5], %s358
          %361 = dma.done %s356, 128
        $region56: #{tpu_custom_call.1} parent=51 // pred_fallthru
          _
      $region52: #{tpu_custom_call.1} parent=5 // pred_fallthru
        _
    $region6: #{tpu_custom_call.1} parent=1 // loop_footer
      %s21 = sadd.s32 1, %s17
    $region7: #{tpu_custom_call.1} parent=1 // loop_footer_branch
      %16 = sbr.rel target = $region3
    $region8: #{tpu_custom_call.1} parent=1 // loop_exit
      _
    %362 = vsyncpa [#allocation3], 1
    %s363 = scalar_lea.sflag [#allocation3], 1
    %364 = vsyncpa %s363, 1
    %365 = vsyncpa [#allocation4], 1
    %s366 = scalar_lea.sflag [#allocation4], 1
    %367 = vsyncpa %s366, 1

</llo_original>
